<compile_context>
chip_gen: v7x
topology: tpu7x:2x2x1
jax: 0.10.0
libtpu: 0.0.40
codegen_flags: <defaults>
</compile_context>

<pallas_src>
import functools

import jax
import jax.numpy as jnp
from jax.experimental import pallas as pl
from jax.experimental.pallas import tpu as pltpu

LANES = 128
SUBLANES = 8
MAX_TILE_BYTES = 1 << 20  # ~1 MiB per input per block


def _l1_kernel(x_ref, y_ref, o_ref, acc_ref, *,
               r_valid, t_valid, r_tile, t_tile, mask_rows, mask_cols):
    """Accumulate sum(|x - y|) over the time axis; emit a per-row-tile partial."""
    i = pl.program_id(0)           # row-tile index ("parallel")
    j = pl.program_id(1)           # time-tile index (reduction, "arbitrary")

    @pl.when(j == 0)
    def _init():
        acc_ref[...] = jnp.zeros_like(acc_ref)

    x = x_ref[...].astype(jnp.float32)
    y = y_ref[...].astype(jnp.float32)
    diff = jnp.abs(x - y)

    if mask_rows or mask_cols:
        # Ragged edge tiles extend past the true (R, T) extent; zero the OOB
        # elements (their contents are unspecified).  Pure VPU filler work.
        valid = None
        if mask_cols:
            col = jax.lax.broadcasted_iota(jnp.int32, diff.shape, 1) + j * t_tile
            valid = col < t_valid
        if mask_rows:
            row = jax.lax.broadcasted_iota(jnp.int32, diff.shape, 0) + i * r_tile
            rvalid = row < r_valid
            valid = rvalid if valid is None else (valid & rvalid)
        diff = jnp.where(valid, diff, 0.0)

    acc_ref[...] += diff           # elementwise accumulate; no per-step reduce

    @pl.when(j == pl.num_programs(1) - 1)
    def _finalize():
        o_ref[0, 0] = jnp.sum(acc_ref[...])


def _pick_tiles(r, t, itemsize, max_tile_bytes):
    """Lane/sublane-aligned (r_tile, t_tile) with r_tile*t_tile*itemsize ~<= budget."""
    max_elems = max(SUBLANES * LANES, max_tile_bytes // itemsize)
    # Time (lane) tile: full extent if affordable with >= 8 rows, else a
    # multiple of 128.
    if t <= max_elems // SUBLANES:
        t_tile = t
    else:
        t_tile = max(LANES, (max_elems // SUBLANES) // LANES * LANES)
    # Row (sublane) tile: full extent if affordable, else a multiple of 8.
    rows_budget = max(SUBLANES, max_elems // max(t_tile, 1))
    if r <= rows_budget:
        r_tile = r
    else:
        r_tile = max(SUBLANES, rows_budget // SUBLANES * SUBLANES)
    return r_tile, t_tile


def l1_wav(input_wav: jax.Array, target_wav: jax.Array, *,
           max_tile_bytes: int = MAX_TILE_BYTES) -> jax.Array:
    """Pallas equivalent of L1_wav()(input, target) == F.l1_loss(input, target)."""
    assert input_wav.shape == target_wav.shape, "l1_loss requires matching shapes"
    out_dtype = jnp.result_type(input_wav.dtype, target_wav.dtype)
    n = input_wav.size
    if n == 0:
        # torch.mean over an empty tensor is NaN.
        return jnp.array(jnp.nan, dtype=out_dtype)

    # Free reshape for contiguous inputs (collapse leading dims); no pad copy.
    t = input_wav.shape[-1] if input_wav.ndim >= 1 else 1
    r = n // t
    x = input_wav.reshape(r, t)
    y = target_wav.reshape(r, t)

    itemsize = max(jnp.dtype(x.dtype).itemsize, jnp.dtype(y.dtype).itemsize)
    r_tile, t_tile = _pick_tiles(r, t, itemsize, max_tile_bytes)
    num_r = pl.cdiv(r, r_tile)
    num_t = pl.cdiv(t, t_tile)
    mask_rows = (r % r_tile) != 0
    mask_cols = (t % t_tile) != 0

    kernel = functools.partial(
        _l1_kernel,
        r_valid=r, t_valid=t,
        r_tile=r_tile, t_tile=t_tile,
        mask_rows=mask_rows, mask_cols=mask_cols,
    )

    partials = pl.pallas_call(
        kernel,
        out_shape=jax.ShapeDtypeStruct((num_r, 1), jnp.float32),
        grid_spec=pltpu.PrefetchScalarGridSpec(
            num_scalar_prefetch=0,
            grid=(num_r, num_t),
            in_specs=[
                pl.BlockSpec((r_tile, t_tile), lambda i, j: (i, j)),
                pl.BlockSpec((r_tile, t_tile), lambda i, j: (i, j)),
            ],
            out_specs=pl.BlockSpec(
                (1, 1), lambda i, j: (i, 0), memory_space=pltpu.MemorySpace.SMEM
            ),
            scratch_shapes=[pltpu.VMEM((r_tile, t_tile), jnp.float32)],
        ),
        compiler_params=pltpu.CompilerParams(
            # Row-tile axis is independent (distinct output blocks) -> megacore
            # shardable on v7x; time axis is the resident-accumulator reduction.
            dimension_semantics=("parallel", "arbitrary"),
        ),
        cost_estimate=pl.CostEstimate(
            flops=2 * n, transcendentals=0,
            bytes_accessed=2 * n * itemsize + 4 * num_r,
        ),
    )(x, y)

    # Tiny finalize outside the kernel: sum per-row-tile partials, scale by 1/N.
    total = jnp.sum(partials)
    return (total * jnp.float32(1.0 / float(n))).astype(out_dtype)


if __name__ == "__main__":
    key = jax.random.PRNGKey(0)
    k1, k2 = jax.random.split(key)

    # 1) Waveform-shaped inputs: (batch=2, channels=4, time=1000).
    #    Single large block (grid (1,1)), full-extent tile, no masking.
    shape = (2, 4, 1000)
    inp = jax.random.normal(k1, shape, dtype=jnp.float32)
    tgt = jax.random.normal(k2, shape, dtype=jnp.float32)
    ref = jnp.mean(jnp.abs(inp - tgt))
    loss = l1_wav(inp, tgt)
    jax.block_until_ready(loss)
    assert jnp.allclose(loss, ref, rtol=1e-5, atol=1e-6), (loss, ref)

    # 2) Force tiny tiles: 2-D grid with ragged last tiles along BOTH axes
    #    (rows 15 % 8 != 0, time 260 % 128 != 0) to exercise the in-kernel masks.
    shape2 = (3, 5, 260)
    a = jax.random.normal(k1, shape2, dtype=jnp.float32)
    b = jax.random.normal(k2, shape2, dtype=jnp.float32)
    ref2 = jnp.mean(jnp.abs(a - b))
    loss2 = l1_wav(a, b, max_tile_bytes=4096)
    jax.block_until_ready(loss2)
    assert jnp.allclose(loss2, ref2, rtol=1e-5, atol=1e-6), (loss2, ref2)

    # 3) bf16 inputs: transported in native dtype, accumulated in f32,
    #    returned as bf16 (matching F.l1_loss dtype behavior).
    inp16 = inp.astype(jnp.bfloat16)
    tgt16 = tgt.astype(jnp.bfloat16)
    loss16 = l1_wav(inp16, tgt16)
    jax.block_until_ready(loss16)
    assert loss16.dtype == jnp.bfloat16, loss16.dtype
    ref16 = jnp.mean(jnp.abs(inp16.astype(jnp.float32) - tgt16.astype(jnp.float32)))
    assert jnp.allclose(loss16.astype(jnp.float32), ref16, rtol=2e-2, atol=2e-2), (
        loss16, ref16)

    print("KERNEL_OK")
</pallas_src>

<mosaic_0001>
module attributes {stable_mosaic.version = 11 : i64} {
  func.func @_l1_kernel(%arg0: i32, %arg1: i32, %arg2: memref<8x1000xf32, #tpu.memory_space<vmem>>, %arg3: memref<8x1000xf32, #tpu.memory_space<vmem>>, %arg4: memref<1x1xf32, #tpu.memory_space<smem>>, %arg5: memref<8x1000xf32, #tpu.memory_space<vmem>>) attributes {dimension_semantics = [#tpu.dimension_semantics<parallel>, #tpu.dimension_semantics<arbitrary>], iteration_bounds = array<i64: 1, 1>, scalar_prefetch = 0 : i64, scratch_operands = 1 : i64, tpu.core_type = #tpu.core_type<tc>, window_params = [{transform_indices = @transform_0, window_bounds = array<i64: 8, 1000>}, {transform_indices = @transform_1, window_bounds = array<i64: 8, 1000>}, {transform_indices = @transform_2, window_bounds = array<i64: 1, 1>}]} {
    %c0_i32 = arith.constant 0 : i32
    %0 = arith.cmpi eq, %arg1, %c0_i32 : i32
    %1 = arith.extui %0 : i1 to i32
    %c0_i32_0 = arith.constant 0 : i32
    %2 = arith.cmpi ne, %1, %c0_i32_0 : i32
    scf.if %2 {
      %cst = arith.constant 0.000000e+00 : f32
      %13 = vector.broadcast %cst : f32 to vector<8x1000xf32>
      %c0_10 = arith.constant 0 : index
      %c0_11 = arith.constant 0 : index
      %14 = vector.load %arg5[%c0_10, %c0_11] : memref<8x1000xf32, #tpu.memory_space<vmem>>, vector<8x1000xf32>
      tpu.vector_store %arg5[%c0_10, %c0_11], %13 {strides = array<i32>} : memref<8x1000xf32, #tpu.memory_space<vmem>>, vector<8x1000xf32>,
    } else {
    }
    %c0 = arith.constant 0 : index
    %c0_1 = arith.constant 0 : index
    %3 = vector.load %arg2[%c0, %c0_1] : memref<8x1000xf32, #tpu.memory_space<vmem>>, vector<8x1000xf32>
    %c0_2 = arith.constant 0 : index
    %c0_3 = arith.constant 0 : index
    %4 = vector.load %arg3[%c0_2, %c0_3] : memref<8x1000xf32, #tpu.memory_space<vmem>>, vector<8x1000xf32>
    %5 = arith.subf %3, %4 : vector<8x1000xf32>
    %6 = math.absf %5 : vector<8x1000xf32>
    %c0_4 = arith.constant 0 : index
    %c0_5 = arith.constant 0 : index
    %7 = vector.load %arg5[%c0_4, %c0_5] : memref<8x1000xf32, #tpu.memory_space<vmem>>, vector<8x1000xf32>
    %8 = arith.addf %7, %6 : vector<8x1000xf32>
    %c0_6 = arith.constant 0 : index
    %c0_7 = arith.constant 0 : index
    %9 = vector.load %arg5[%c0_6, %c0_7] : memref<8x1000xf32, #tpu.memory_space<vmem>>, vector<8x1000xf32>
    tpu.vector_store %arg5[%c0_6, %c0_7], %8 {strides = array<i32>} : memref<8x1000xf32, #tpu.memory_space<vmem>>, vector<8x1000xf32>,
    %c0_i32_8 = arith.constant 0 : i32
    %10 = arith.cmpi eq, %arg1, %c0_i32_8 : i32
    %11 = arith.extui %10 : i1 to i32
    %c0_i32_9 = arith.constant 0 : i32
    %12 = arith.cmpi ne, %11, %c0_i32_9 : i32
    scf.if %12 {
      %c0_10 = arith.constant 0 : index
      %c0_11 = arith.constant 0 : index
      %13 = vector.load %arg5[%c0_10, %c0_11] : memref<8x1000xf32, #tpu.memory_space<vmem>>, vector<8x1000xf32>
      %14 = vector.shape_cast %13 : vector<8x1000xf32> to vector<1x8x1000xf32>
      %cst = arith.constant dense<0.000000e+00> : vector<1xf32>
      %15 = vector.multi_reduction <add>, %14, %cst [1, 2] : vector<1x8x1000xf32> to vector<1xf32>
      %16 = vector.shape_cast %15 : vector<1xf32> to vector<1x1x1xf32>
      %17 = vector.extract %16[0, 0, 0] : f32 from vector<1x1x1xf32>
      %c0_12 = arith.constant 0 : index
      %c0_13 = arith.constant 0 : index
      %18 = memref.load %arg4[%c0_12, %c0_13] : memref<1x1xf32, #tpu.memory_space<smem>>
      memref.store %17, %arg4[%c0_12, %c0_13] : memref<1x1xf32, #tpu.memory_space<smem>>
    } else {
    }
    return
  }
  func.func @transform_0(%arg0: i32, %arg1: i32) -> (i32, i32) {
    %c0_i32 = arith.constant 0 : i32
    return %arg0, %arg1 : i32, i32
  }
  func.func @transform_1(%arg0: i32, %arg1: i32) -> (i32, i32) {
    %c0_i32 = arith.constant 0 : i32
    return %arg0, %arg1 : i32, i32
  }
  func.func @transform_2(%arg0: i32, %arg1: i32) -> (i32, i32) {
    %c0_i32 = arith.constant 0 : i32
    %c0_i32_0 = arith.constant 0 : i32
    return %arg0, %c0_i32 : i32, i32
  }
}

</mosaic_0001>

<llo_original>
// kernel: tpu_custom_call.1
$region0: #{tpu_custom_call.1}
  #allocation0 [shape = 'u32[]', space=smem, size = 0x4, offset = 0x4, fixed_abs, tag = 'smem constant byte address 0x4 - core index']
  #allocation1 [shape = 'u32[144,128]{1,0:T(1,128)}', space=vmem, size = 0x12000, scoped, tag = 'internal scratch']
  #allocation2 [shape = 'f32[8,1000]{1,0:T(8,128)}', space=vmem, size = 0x8000, scoped, tag = 'scratch operand']
  %s0 = inlined_call_operand.hbm [shape: f32[8,1000], index: 0, kind: input, shape index: {}]
  %s1 = inlined_call_operand.hbm [shape: f32[8,1000], index: 1, kind: input, shape index: {}]
  %s2 = inlined_call_operand.hbm [shape: f32[1,1], index: 2, kind: output, shape index: {}]
  %s3 = sld [smem:[#allocation0]]
  $region34: #{tpu_custom_call.1} parent=0
    _
  %s5 = ssub.s32 1, %s3
  %s6 = scalar_select 0, %s5, %s3
  $region1: #{tpu_custom_call.1} parent=0
    #allocation3 [shape = 'u8[32768]{0}', space=vmem, size = 0x8000, scoped, tag = 'input window, operand 0, single buffered']
    #allocation4 [shape = 's32[1]{0}', space=sflag, size = 0x4, scoped, tag = 'scoped memory for tpu_custom_call.1']
    #allocation5 [shape = 's32[1]{0}', space=sflag, size = 0x4, scoped, tag = 'scoped memory for tpu_custom_call.1']
    #allocation6 [shape = 'u8[32768]{0}', space=vmem, size = 0x8000, scoped, tag = 'input window, operand 1, single buffered']
    #allocation7 [shape = 's32[1]{0}', space=sflag, size = 0x4, scoped, tag = 'scoped memory for tpu_custom_call.1']
    #allocation8 [shape = 'u8[512]{0}', space=smem, size = 0x200, scoped, tag = 'output window, operand 0, single buffered']
    %7 = vsyncpa [#allocation4], 0
    %8 = vsyncpa [#allocation7], 0
    %9 = vsyncpa [#allocation5], 0
    // Predicated region
    $region2: #{tpu_custom_call.1} parent=1 // pred_check
      _
    $region3: #{tpu_custom_call.1} parent=1 // pred_check_branch
      %11 = sbr.rel (0) target = $region5
    $region4: #{tpu_custom_call.1} parent=1 // pred_region
      %s13 = ssub.s32 1024, 1024
      %14 = vsyncadd [#allocation4], %s13
      %s16 = sshll.u32 [#allocation3], 4
      %s17 = int_to_ptr.vmem [resolvable:$true] %s16
      %19 = dma.hbm_to_vmem [thread:$0]  %s0, 1024, %s17, [#allocation4]
    $region5: #{tpu_custom_call.1} parent=1 // pred_fallthru
      _
    // Predicated region
    $region6: #{tpu_custom_call.1} parent=1 // pred_check
      _
    $region7: #{tpu_custom_call.1} parent=1 // pred_check_branch
      %21 = sbr.rel (0) target = $region9
    $region8: #{tpu_custom_call.1} parent=1 // pred_region
      %s23 = ssub.s32 1024, 1024
      %24 = vsyncadd [#allocation7], %s23
      %s26 = sshll.u32 [#allocation6], 4
      %s27 = int_to_ptr.vmem [resolvable:$true] %s26
      %29 = dma.hbm_to_vmem [thread:$0]  %s1, 1024, %s27, [#allocation7]
    $region9: #{tpu_custom_call.1} parent=1 // pred_fallthru
      _
    // Predicated region
    $region10: #{tpu_custom_call.1} parent=1 // pred_check
      _
    $region11: #{tpu_custom_call.1} parent=1 // pred_check_branch
      %31 = sbr.rel (0) target = $region13
    $region12: #{tpu_custom_call.1} parent=1 // pred_region
      %32 = dma.done [#allocation4], 1024
    $region13: #{tpu_custom_call.1} parent=1 // pred_fallthru
      _
    // Predicated region
    $region14: #{tpu_custom_call.1} parent=1 // pred_check
      _
    $region15: #{tpu_custom_call.1} parent=1 // pred_check_branch
      %34 = sbr.rel (0) target = $region17
    $region16: #{tpu_custom_call.1} parent=1 // pred_region
      %35 = dma.done [#allocation7], 1024
    $region17: #{tpu_custom_call.1} parent=1 // pred_fallthru
      _
    %p36 = scmp.eq.s32.totalorder 0, 0
    // Predicated region
    $region18: #{tpu_custom_call.1} parent=1 // pred_check
      %p37 = pneg %p36
    $region19: #{tpu_custom_call.1} parent=1 // pred_check_branch
      %39 = sbr.rel (%p37) target = $region21
    $region20: #{tpu_custom_call.1} parent=1 // pred_region
      %40 = vst [vmem:[#allocation2] sm:$0xff] 0.0
      %41 = vst [vmem:[#allocation2 + $0x8] sm:$0xff] 0.0
      %42 = vst [vmem:[#allocation2 + $0x10] sm:$0xff] 0.0
      %43 = vst [vmem:[#allocation2 + $0x18] sm:$0xff] 0.0
      %44 = vst [vmem:[#allocation2 + $0x20] sm:$0xff] 0.0
      %45 = vst [vmem:[#allocation2 + $0x28] sm:$0xff] 0.0
      %46 = vst [vmem:[#allocation2 + $0x30] sm:$0xff] 0.0
      %vm47 = vcmask 850944
      %48 = vst.msk [vmem:[#allocation2 + $0x38] sm:$0xff] %vm47, 0.0
    $region21: #{tpu_custom_call.1} parent=1 // pred_fallthru
      _
    %v49 = vld [vmem:[#allocation3] sm:$0xff]
    %v50 = vld [vmem:[#allocation3 + $0x8] sm:$0xff]
    %v51 = vld [vmem:[#allocation3 + $0x10] sm:$0xff]
    %v52 = vld [vmem:[#allocation3 + $0x18] sm:$0xff]
    %v53 = vld [vmem:[#allocation3 + $0x20] sm:$0xff]
    %v54 = vld [vmem:[#allocation3 + $0x28] sm:$0xff]
    %v55 = vld [vmem:[#allocation3 + $0x30] sm:$0xff]
    %v56 = vld [vmem:[#allocation3 + $0x38] sm:$0xff]
    %v57 = vld [vmem:[#allocation6] sm:$0xff]
    %v58 = vld [vmem:[#allocation6 + $0x8] sm:$0xff]
    %v59 = vld [vmem:[#allocation6 + $0x10] sm:$0xff]
    %v60 = vld [vmem:[#allocation6 + $0x18] sm:$0xff]
    %v61 = vld [vmem:[#allocation6 + $0x20] sm:$0xff]
    %v62 = vld [vmem:[#allocation6 + $0x28] sm:$0xff]
    %v63 = vld [vmem:[#allocation6 + $0x30] sm:$0xff]
    %v64 = vld [vmem:[#allocation6 + $0x38] sm:$0xff]
    %v65 = vsub.f32 %v49, %v57
    %v66 = vsub.f32 %v50, %v58
    %v67 = vsub.f32 %v51, %v59
    %v68 = vsub.f32 %v52, %v60
    %v69 = vsub.f32 %v53, %v61
    %v70 = vsub.f32 %v54, %v62
    %v71 = vsub.f32 %v55, %v63
    %v72 = vsub.f32 %v56, %v64
    %v73 = vand.u32 2147483647, %v65
    %v74 = vand.u32 2147483647, %v66
    %v75 = vand.u32 2147483647, %v67
    %v76 = vand.u32 2147483647, %v68
    %v77 = vand.u32 2147483647, %v69
    %v78 = vand.u32 2147483647, %v70
    %v79 = vand.u32 2147483647, %v71
    %v80 = vand.u32 2147483647, %v72
    %v81 = vld [vmem:[#allocation2] sm:$0xff]
    %v82 = vld [vmem:[#allocation2 + $0x8] sm:$0xff]
    %v83 = vld [vmem:[#allocation2 + $0x10] sm:$0xff]
    %v84 = vld [vmem:[#allocation2 + $0x18] sm:$0xff]
    %v85 = vld [vmem:[#allocation2 + $0x20] sm:$0xff]
    %v86 = vld [vmem:[#allocation2 + $0x28] sm:$0xff]
    %v87 = vld [vmem:[#allocation2 + $0x30] sm:$0xff]
    %v88 = vld [vmem:[#allocation2 + $0x38] sm:$0xff]
    %v89 = vadd.f32 %v81, %v73
    %v90 = vadd.f32 %v82, %v74
    %v91 = vadd.f32 %v83, %v75
    %v92 = vadd.f32 %v84, %v76
    %v93 = vadd.f32 %v85, %v77
    %v94 = vadd.f32 %v86, %v78
    %v95 = vadd.f32 %v87, %v79
    %v96 = vadd.f32 %v88, %v80
    %97 = vst [vmem:[#allocation2] sm:$0xff] %v89
    %98 = vst [vmem:[#allocation2 + $0x8] sm:$0xff] %v90
    %99 = vst [vmem:[#allocation2 + $0x10] sm:$0xff] %v91
    %100 = vst [vmem:[#allocation2 + $0x18] sm:$0xff] %v92
    %101 = vst [vmem:[#allocation2 + $0x20] sm:$0xff] %v93
    %102 = vst [vmem:[#allocation2 + $0x28] sm:$0xff] %v94
    %103 = vst [vmem:[#allocation2 + $0x30] sm:$0xff] %v95
    %vm104 = vcmask 850944
    %105 = vst.msk [vmem:[#allocation2 + $0x38] sm:$0xff] %vm104, %v96
    // Predicated region
    $region22: #{tpu_custom_call.1} parent=1 // pred_check
      %p106 = pneg %p36
    $region23: #{tpu_custom_call.1} parent=1 // pred_check_branch
      %108 = sbr.rel (%p106) target = $region25
    $region24: #{tpu_custom_call.1} parent=1 // pred_region
      %v109 = vld [vmem:[#allocation2] sm:$0xff]
      %v110 = vld [vmem:[#allocation2 + $0x8] sm:$0xff]
      %v111 = vld [vmem:[#allocation2 + $0x10] sm:$0xff]
      %v112 = vld [vmem:[#allocation2 + $0x18] sm:$0xff]
      %v113 = vld [vmem:[#allocation2 + $0x20] sm:$0xff]
      %v114 = vld [vmem:[#allocation2 + $0x28] sm:$0xff]
      %v115 = vld [vmem:[#allocation2 + $0x30] sm:$0xff]
      %v116 = vld [vmem:[#allocation2 + $0x38] sm:$0xff]
      %v117 = vadd.f32 %v109, %v110
      %v118 = vadd.f32 %v117, %v111
      %v119 = vadd.f32 %v118, %v112
      %v120 = vadd.f32 %v119, %v113
      %v121 = vadd.f32 %v120, %v114
      %v122 = vadd.f32 %v121, %v115
      %v123 = vsel %vm104, %v116, 0.0
      %v124 = vadd.f32 %v122, %v123
      %125 = vadd.xlane.f32.xlu0 %v124
      %v126 = vpop.xlane.xlu0 %125
      %v127 = vrot.slane %v126, 4
      %v128 = vadd.f32 %v126, %v127
      %v129 = vrot.slane %v128, 2
      %v130 = vadd.f32 %v128, %v129
      %v131 = vrot.slane %v130, 1
      %v132 = vadd.f32 %v130, %v131
      %s133 = vtos %v132
      %s134 = scalar_lea.smem [#allocation8], 0
      %135 = sst [smem:[%s134]] %s133
    $region25: #{tpu_custom_call.1} parent=1 // pred_fallthru
      _
    // Predicated region
    $region26: #{tpu_custom_call.1} parent=1 // pred_check
      _
    $region27: #{tpu_custom_call.1} parent=1 // pred_check_branch
      %137 = sbr.rel (0) target = $region29
    $region28: #{tpu_custom_call.1} parent=1 // pred_region
      %s139 = ssub.s32 16, 16
      %140 = vsyncadd [#allocation5], %s139
      %143 = dma.smem_to_hbm [#allocation8], 16, %s2, [#allocation5]
    $region29: #{tpu_custom_call.1} parent=1 // pred_fallthru
      _
    // Predicated region
    $region30: #{tpu_custom_call.1} parent=1 // pred_check
      _
    $region31: #{tpu_custom_call.1} parent=1 // pred_check_branch
      %145 = sbr.rel (0) target = $region33
    $region32: #{tpu_custom_call.1} parent=1 // pred_region
      %146 = dma.done [#allocation5], 16
    $region33: #{tpu_custom_call.1} parent=1 // pred_fallthru
      _
    %147 = sfence
    %148 = vsyncpa [#allocation4], 1
    %149 = vsyncpa [#allocation7], 1
    %150 = vsyncpa [#allocation5], 1

</llo_original>
